<compile_context>
chip_gen: v6e
topology: v6e:2x2x1
jax: 0.10.0
libtpu: 0.0.40
codegen_flags: <defaults>
</compile_context>

<pallas_src>
import jax
import jax.numpy as jnp
from jax.experimental import pallas as pl
from jax.experimental.pallas import tpu as pltpu


def _round_up(a: int, b: int) -> int:
    return ((a + b - 1) // b) * b


def _vmem_budgets():
    """(scoped vmem limit, working-set budget) in bytes, generation aware."""
    try:
        cap = int(pltpu.get_tpu_info().vmem_capacity_bytes)
    except Exception:
        cap = 64 * 1024 * 1024  # conservative fallback (v7x per-TC VMEM)
    limit = (cap * 3) // 4       # ~96 MiB on 128 MiB parts, ~48 MiB on v7x
    budget = (limit * 5) // 6    # ~80 MiB / ~40 MiB working-set budget
    return limit, budget


def _maybe_pad2(a, rows, cols):
    pr, pc = rows - a.shape[0], cols - a.shape[1]
    if pr == 0 and pc == 0:
        return a
    return jnp.pad(a, ((0, pr), (0, pc)))


def _single_buffered_spec(block_shape, index_map):
    """BlockSpec with a single pipeline buffer (index map is constant -> DMA'd once).

    Returns (spec, buffer_count) so the VMEM accounting matches what was requested.
    """
    try:
        return pl.BlockSpec(block_shape, index_map,
                            pipeline_mode=pl.Buffered(1)), 1
    except Exception:
        return pl.BlockSpec(block_shape, index_map), 2


# ---------------- Path A: x fully VMEM-resident, 1-D grid over C row strips ----


def _make_resident_kernel(compute_dtype):
    def kernel(c_ref, x_ref, o_ref):
        # Coefficient arrives as raw f32; cast in-kernel (one HBM pass over N^2).
        c = c_ref[...].astype(compute_dtype)
        o_ref[...] = jnp.dot(
            c, x_ref[...], preferred_element_type=jnp.float32
        ).astype(o_ref.dtype)
    return kernel


# ---------------- Path B: tiled streaming matmul --------------------------------


def _make_tiled_fullk_kernel(compute_dtype):
    # Full-K contraction: 2-D grid, single dot, output written exactly once.
    def kernel(c_ref, x_ref, o_ref):
        o_ref[...] = jnp.dot(
            c_ref[...].astype(compute_dtype), x_ref[...],
            preferred_element_type=jnp.float32
        ).astype(o_ref.dtype)
    return kernel


def _make_tiled_acc_kernel(compute_dtype):
    # Multi-k contraction: f32 scratch accumulator, output written once on last step.
    def kernel(c_ref, x_ref, o_ref, acc_ref):
        @pl.when(pl.program_id(2) == 0)
        def _():
            acc_ref[...] = jnp.zeros_like(acc_ref)

        acc_ref[...] += jnp.dot(
            c_ref[...].astype(compute_dtype), x_ref[...],
            preferred_element_type=jnp.float32
        )

        @pl.when(pl.program_id(2) == pl.num_programs(2) - 1)
        def _():
            o_ref[...] = acc_ref[...].astype(o_ref.dtype)
    return kernel


def self_expression_forward(
    coefficient,
    x,
    *,
    tm: int = 512,
    tn: int = 1024,
    tk: int | None = None,
    use_bf16: bool = True,
    force_tiled: bool = False,
):
    """y = Coefficient @ x (SelfExpression.forward) as a Pallas TPU matmul.

    tm/tn/tk tune the streaming (Path B) tiles; tk=None prefers a full-K contraction.
    """
    N, K = coefficient.shape
    K2, D = x.shape
    assert K == K2, "Coefficient inner dim must match x rows"

    out_dtype = x.dtype
    compute_dtype = (jnp.bfloat16 if use_bf16
                     else jnp.promote_types(coefficient.dtype, x.dtype))

    c_itemsize = jnp.dtype(coefficient.dtype).itemsize   # C fed raw, cast in-kernel
    x_itemsize = jnp.dtype(compute_dtype).itemsize
    out_itemsize = jnp.dtype(out_dtype).itemsize

    # x is K x D (small relative to the N^2 Coefficient): pre-cast in the wrapper so
    # it only needs compute-dtype bytes per element in VMEM.
    xx = x.astype(compute_dtype)

    K_pad = _round_up(K, 128)
    D_pad = _round_up(D, 128)

    vmem_limit, vmem_budget = _vmem_budgets()

    # ---------------- Path A: keep x resident in VMEM ----------------
    if N <= 128:
        tm_a = _round_up(N, 8)
    elif N <= 512:
        tm_a = 128    # >= 2 grid steps -> both v7x TensorCores busy
    else:
        tm_a = 256
    n_pad_a = _round_up(N, tm_a)

    x_spec, x_nbuf = _single_buffered_spec((K_pad, D_pad), lambda i: (0, 0))
    resident_bytes = (
        x_nbuf * K_pad * D_pad * x_itemsize   # x, single-buffered (DMA'd once)
        + 2 * tm_a * K_pad * c_itemsize       # double-buffered f32 C row strip
        + 2 * tm_a * D_pad * out_itemsize     # double-buffered output slab
    )
    use_resident = (not force_tiled) and resident_bytes <= vmem_budget

    if use_resident:
        c_p = _maybe_pad2(coefficient, n_pad_a, K_pad)
        x_p = _maybe_pad2(xx, K_pad, D_pad)

        cost = pl.CostEstimate(
            flops=2 * n_pad_a * K_pad * D_pad,
            bytes_accessed=(n_pad_a * K_pad * c_itemsize
                            + K_pad * D_pad * x_itemsize
                            + n_pad_a * D_pad * out_itemsize),
            transcendentals=0,
        )

        y_p = pl.pallas_call(
            _make_resident_kernel(compute_dtype),
            out_shape=jax.ShapeDtypeStruct((n_pad_a, D_pad), out_dtype),
            grid_spec=pltpu.PrefetchScalarGridSpec(
                num_scalar_prefetch=0,
                grid=(n_pad_a // tm_a,),
                in_specs=[
                    pl.BlockSpec((tm_a, K_pad), lambda i: (i, 0)),  # C row strip (f32)
                    x_spec,                                          # x, DMA'd once
                ],
                out_specs=pl.BlockSpec((tm_a, D_pad), lambda i: (i, 0)),
            ),
            compiler_params=pltpu.CompilerParams(
                dimension_semantics=("parallel",),
                vmem_limit_bytes=vmem_limit,
            ),
            cost_estimate=cost,
        )(c_p, x_p)
        return y_p[:N, :D]

    # ---------------- Path B: tiled streaming matmul ----------------
    tm_b = min(_round_up(tm, 8), _round_up(N, 8))
    tn_b = min(_round_up(tn, 128), D_pad)

    def _ws(tm_, tn_, tk_):
        w = (2 * tm_ * tk_ * c_itemsize      # double-buffered f32 C tile
             + 2 * tk_ * tn_ * x_itemsize    # double-buffered x tile
             + 2 * tm_ * tn_ * out_itemsize) # double-buffered output tile
        if tk_ < K_pad:
            w += tm_ * tn_ * 4               # f32 accumulator scratch
        return w

    if tk is None:
        candidates = [K_pad] + [t for t in (2048, 1024, 512, 256, 128) if t < K_pad]
    else:
        candidates = [min(_round_up(tk, 128), K_pad)]
    tk_b = candidates[-1]
    for cand in candidates:
        if _ws(tm_b, tn_b, cand) <= vmem_budget:
            tk_b = cand
            break
    while _ws(tm_b, tn_b, tk_b) > vmem_budget and tn_b > 128:
        tn_b = _round_up(max(128, tn_b // 2), 128)
    while _ws(tm_b, tn_b, tk_b) > vmem_budget and tm_b > 8:
        tm_b = max(8, _round_up(tm_b // 2, 8))

    n_pad = _round_up(N, tm_b)
    d_pad = _round_up(D_pad, tn_b)
    k_pad = _round_up(K_pad, tk_b)
    n_steps, d_steps, k_steps = n_pad // tm_b, d_pad // tn_b, k_pad // tk_b

    c_p = _maybe_pad2(coefficient, n_pad, k_pad)
    x_p = _maybe_pad2(xx, k_pad, d_pad)

    cost = pl.CostEstimate(
        flops=2 * n_pad * k_pad * d_pad,
        bytes_accessed=(n_pad * k_pad * c_itemsize * d_steps    # C re-read per j tile
                        + k_pad * d_pad * x_itemsize * n_steps  # x re-read per i tile
                        + n_pad * d_pad * out_itemsize),
        transcendentals=0,
    )

    if k_steps == 1:
        y_p = pl.pallas_call(
            _make_tiled_fullk_kernel(compute_dtype),
            out_shape=jax.ShapeDtypeStruct((n_pad, d_pad), out_dtype),
            grid_spec=pltpu.PrefetchScalarGridSpec(
                num_scalar_prefetch=0,
                grid=(n_steps, d_steps),
                in_specs=[
                    pl.BlockSpec((tm_b, k_pad), lambda i, j: (i, 0)),
                    pl.BlockSpec((k_pad, tn_b), lambda i, j: (0, j)),
                ],
                out_specs=pl.BlockSpec((tm_b, tn_b), lambda i, j: (i, j)),
            ),
            compiler_params=pltpu.CompilerParams(
                dimension_semantics=("parallel", "parallel"),
                vmem_limit_bytes=vmem_limit,
            ),
            cost_estimate=cost,
        )(c_p, x_p)
    else:
        y_p = pl.pallas_call(
            _make_tiled_acc_kernel(compute_dtype),
            out_shape=jax.ShapeDtypeStruct((n_pad, d_pad), out_dtype),
            grid_spec=pltpu.PrefetchScalarGridSpec(
                num_scalar_prefetch=0,
                grid=(n_steps, d_steps, k_steps),
                in_specs=[
                    pl.BlockSpec((tm_b, tk_b), lambda i, j, k: (i, k)),  # C tile
                    pl.BlockSpec((tk_b, tn_b), lambda i, j, k: (k, j)),  # x tile
                ],
                out_specs=pl.BlockSpec((tm_b, tn_b), lambda i, j, k: (i, j)),
                scratch_shapes=[pltpu.VMEM((tm_b, tn_b), jnp.float32)],
            ),
            compiler_params=pltpu.CompilerParams(
                dimension_semantics=("parallel", "parallel", "arbitrary"),
                vmem_limit_bytes=vmem_limit,
            ),
            cost_estimate=cost,
        )(c_p, x_p)
    return y_p[:N, :D]


if __name__ == "__main__":
    key = jax.random.PRNGKey(0)

    def make_inputs(k, n, d):
        k_coe, k_x = jax.random.split(k)
        coe = 1e-2 * jax.random.normal(k_coe, (n, n), dtype=jnp.float32)
        coe = coe * (1.0 - jnp.eye(n, dtype=jnp.float32))  # zero self-connection diag
        x = jax.random.normal(k_x, (n, d), dtype=jnp.float32)
        return coe, x

    def check(y, coe, x, name):
        # Tight check against the bf16-rounded-input reference (matches the kernel's
        # MXU precision: bf16 operands, f32 accumulation)...
        coe_b = coe.astype(jnp.bfloat16).astype(jnp.float32)
        x_b = x.astype(jnp.bfloat16).astype(jnp.float32)
        y_bf_ref = coe_b @ x_b
        assert y.shape == y_bf_ref.shape, name
        assert jnp.allclose(y, y_bf_ref, atol=2e-3, rtol=2e-3), name
        # ...and a looser check against the full-f32 reference.
        assert jnp.allclose(y, coe @ x, atol=1e-2, rtol=5e-2), name

    k1, k2, k3 = jax.random.split(key, 3)

    # 1) Small demo shape (N=128 samples, D=256 features): resident path, 1 step.
    coe1, x1 = make_inputs(k1, 128, 256)
    y1 = self_expression_forward(coe1, x1)
    jax.block_until_ready(y1)
    check(y1, coe1, x1, "resident")

    # 2) Non-tile-divisible shape: exercises zero-padding + output slice (grid of 2).
    coe2, x2 = make_inputs(k2, 200, 200)
    y2 = self_expression_forward(coe2, x2)
    jax.block_until_ready(y2)
    check(y2, coe2, x2, "resident_padded")

    # 3) Tiled streaming path with a real k-accumulation loop (forced tk=128).
    coe3, x3 = make_inputs(k3, 512, 384)
    y3 = self_expression_forward(coe3, x3, tm=256, tn=128, tk=128, force_tiled=True)
    jax.block_until_ready(y3)
    check(y3, coe3, x3, "tiled_multi_k")

    # 4) Tiled streaming path with auto tiles (full-K, 2-D grid).
    coe4, x4 = make_inputs(k3, 512, 384)
    y4 = self_expression_forward(coe4, x4, force_tiled=True)
    jax.block_until_ready(y4)
    check(y4, coe4, x4, "tiled_full_k")

    print("KERNEL_OK")
</pallas_src>

<mosaic_0001>
module attributes {stable_mosaic.version = 11 : i64} {
  func.func @kernel(%arg0: i32, %arg1: memref<128x128xf32, #tpu.memory_space<vmem>>, %arg2: memref<128x256xbf16, #tpu.memory_space<vmem>>, %arg3: memref<128x256xf32, #tpu.memory_space<vmem>>) attributes {dimension_semantics = [#tpu.dimension_semantics<parallel>], iteration_bounds = array<i64: 1>, scalar_prefetch = 0 : i64, scratch_operands = 0 : i64, tpu.core_type = #tpu.core_type<tc>, window_params = [{transform_indices = @transform_0, window_bounds = array<i64: 128, 128>}, {pipeline_mode = #tpu.pipeline_mode<synchronous>, transform_indices = @transform_1, window_bounds = array<i64: 128, 256>}, {transform_indices = @transform_2, window_bounds = array<i64: 128, 256>}]} {
    %c0 = arith.constant 0 : index
    %c0_0 = arith.constant 0 : index
    %0 = vector.load %arg1[%c0, %c0_0] : memref<128x128xf32, #tpu.memory_space<vmem>>, vector<128x128xf32>
    %1 = arith.truncf %0 : vector<128x128xf32> to vector<128x128xbf16>
    %c0_1 = arith.constant 0 : index
    %c0_2 = arith.constant 0 : index
    %2 = vector.load %arg2[%c0_1, %c0_2] : memref<128x256xbf16, #tpu.memory_space<vmem>>, vector<128x256xbf16>
    %cst = arith.constant dense<0.000000e+00> : vector<128x256xf32>
    %3 = tpu.matmul %1, %2, %cst {dimension_numbers = #tpu.dot_dimension_numbers<[1], [0], [0], [1], [0, 0, 1, 1], [], []>} : vector<128x128xbf16>, vector<128x256xbf16>, vector<128x256xf32> -> vector<128x256xf32>
    %c0_3 = arith.constant 0 : index
    %c0_4 = arith.constant 0 : index
    %4 = vector.load %arg3[%c0_3, %c0_4] : memref<128x256xf32, #tpu.memory_space<vmem>>, vector<128x256xf32>
    tpu.vector_store %arg3[%c0_3, %c0_4], %3 {strides = array<i32>} : memref<128x256xf32, #tpu.memory_space<vmem>>, vector<128x256xf32>,
    return
  }
  func.func @transform_0(%arg0: i32) -> (i32, i32) {
    %c0_i32 = arith.constant 0 : i32
    %c0_i32_0 = arith.constant 0 : i32
    return %arg0, %c0_i32 : i32, i32
  }
  func.func @transform_1(%arg0: i32) -> (i32, i32) {
    %c0_i32 = arith.constant 0 : i32
    %c0_i32_0 = arith.constant 0 : i32
    %c0_i32_1 = arith.constant 0 : i32
    return %c0_i32, %c0_i32_0 : i32, i32
  }
  func.func @transform_2(%arg0: i32) -> (i32, i32) {
    %c0_i32 = arith.constant 0 : i32
    %c0_i32_0 = arith.constant 0 : i32
    return %arg0, %c0_i32 : i32, i32
  }
}

</mosaic_0001>

<llo_original>
// kernel: tpu_custom_call.1
$region0: #{tpu_custom_call.1}
  #allocation0 [shape = 'u32[]', space=smem, size = 0x4, offset = 0x4, fixed_abs, tag = 'smem constant byte address 0x4 - core index']
  #allocation1 [shape = 'u32[144,128]{1,0:T(1,128)}', space=vmem, size = 0x12000, scoped, tag = 'internal scratch']
  %s0 = inlined_call_operand.hbm [shape: f32[128,128], index: 0, kind: input, shape index: {}]
  %s1 = inlined_call_operand.hbm [shape: bf16[128,256], index: 1, kind: input, shape index: {}]
  %s2 = inlined_call_operand.hbm [shape: f32[128,256], index: 2, kind: output, shape index: {}]
  %s3 = sld [smem:[#allocation0]]
  $region26: #{tpu_custom_call.1} parent=0
    _
  %s5 = ssub.s32 1, %s3
  %s6 = scalar_select 0, %s5, %s3
  $region1: #{tpu_custom_call.1} parent=0
    #allocation2 [shape = 'u8[65536]{0}', space=vmem, size = 0x10000, scoped, tag = 'input window, operand 0, single buffered']
    #allocation3 [shape = 's32[1]{0}', space=sflag, size = 0x4, scoped, tag = 'scoped memory for tpu_custom_call.1']
    #allocation4 [shape = 's32[1]{0}', space=sflag, size = 0x4, scoped, tag = 'scoped memory for tpu_custom_call.1']
    #allocation5 [shape = 'u8[65536]{0}', space=vmem, size = 0x10000, scoped, tag = 'input window, operand 1, single buffered']
    #allocation6 [shape = 's32[1]{0}', space=sflag, size = 0x4, scoped, tag = 'scoped memory for tpu_custom_call.1']
    #allocation7 [shape = 'u8[131072]{0}', space=vmem, size = 0x20000, scoped, tag = 'output window, operand 0, single buffered']
    %7 = vsyncpa [#allocation3], 0
    %8 = vsyncpa [#allocation6], 0
    %9 = vsyncpa [#allocation4], 0
    // Predicated region
    $region2: #{tpu_custom_call.1} parent=1 // pred_check
      _
    $region3: #{tpu_custom_call.1} parent=1 // pred_check_branch
      %11 = sbr.rel (0) target = $region5
    $region4: #{tpu_custom_call.1} parent=1 // pred_region
      %s13 = ssub.s32 2048, 2048
      %14 = vsyncadd [#allocation3], %s13
      %s15 = sshll.u32 [#allocation2], 4
      %s16 = int_to_ptr.vmem [resolvable:$true] %s15
      %21 = dma.hbm_to_vmem [thread:$0]  %s0, 2048, %s16, [#allocation3], 128, 128, 8
    $region5: #{tpu_custom_call.1} parent=1 // pred_fallthru
      _
    // Predicated region
    $region6: #{tpu_custom_call.1} parent=1 // pred_check
      _
    $region7: #{tpu_custom_call.1} parent=1 // pred_check_branch
      %23 = sbr.rel (0) target = $region9
    $region8: #{tpu_custom_call.1} parent=1 // pred_region
      %s25 = ssub.s32 2048, 2048
      %26 = vsyncadd [#allocation6], %s25
      %s27 = sshll.u32 [#allocation5], 4
      %s28 = int_to_ptr.vmem [resolvable:$true] %s27
      %33 = dma.hbm_to_vmem [thread:$0]  %s1, 2048, %s28, [#allocation6], 128, 128, 8
    $region9: #{tpu_custom_call.1} parent=1 // pred_fallthru
      _
    // Predicated region
    $region10: #{tpu_custom_call.1} parent=1 // pred_check
      _
    $region11: #{tpu_custom_call.1} parent=1 // pred_check_branch
      %35 = sbr.rel (0) target = $region13
    $region12: #{tpu_custom_call.1} parent=1 // pred_region
      %36 = dma.done [#allocation3], 2048
    $region13: #{tpu_custom_call.1} parent=1 // pred_fallthru
      _
    // Predicated region
    $region14: #{tpu_custom_call.1} parent=1 // pred_check
      _
    $region15: #{tpu_custom_call.1} parent=1 // pred_check_branch
      %38 = sbr.rel (0) target = $region17
    $region16: #{tpu_custom_call.1} parent=1 // pred_region
      %39 = dma.done [#allocation6], 2048
    $region17: #{tpu_custom_call.1} parent=1 // pred_fallthru
      _
    %v41 = vld [vmem:[#allocation2] sm:$0xff]
    %v42 = vld [vmem:[#allocation2 + $0x8] sm:$0xff]
    %v43 = vld [vmem:[#allocation2 + $0x10] sm:$0xff]
    %v44 = vld [vmem:[#allocation2 + $0x18] sm:$0xff]
    %v45 = vld [vmem:[#allocation2 + $0x20] sm:$0xff]
    %v46 = vld [vmem:[#allocation2 + $0x28] sm:$0xff]
    %v47 = vld [vmem:[#allocation2 + $0x30] sm:$0xff]
    %v48 = vld [vmem:[#allocation2 + $0x38] sm:$0xff]
    %v49 = vld [vmem:[#allocation2 + $0x40] sm:$0xff]
    %v50 = vld [vmem:[#allocation2 + $0x48] sm:$0xff]
    %v51 = vld [vmem:[#allocation2 + $0x50] sm:$0xff]
    %v52 = vld [vmem:[#allocation2 + $0x58] sm:$0xff]
    %v53 = vld [vmem:[#allocation2 + $0x60] sm:$0xff]
    %v54 = vld [vmem:[#allocation2 + $0x68] sm:$0xff]
    %v55 = vld [vmem:[#allocation2 + $0x70] sm:$0xff]
    %v56 = vld [vmem:[#allocation2 + $0x78] sm:$0xff]
    %v57 = vpack.c.bf16 %v42, %v41
    %v58 = vpack.c.bf16 %v44, %v43
    %v59 = vpack.c.bf16 %v46, %v45
    %v60 = vpack.c.bf16 %v48, %v47
    %v61 = vpack.c.bf16 %v50, %v49
    %v62 = vpack.c.bf16 %v52, %v51
    %v63 = vpack.c.bf16 %v54, %v53
    %v64 = vpack.c.bf16 %v56, %v55
    %v65 = vld [vmem:[#allocation5] sm:$0xff]
    %v66 = vld [vmem:[#allocation5 + $0x8] sm:$0xff]
    %v67 = vld [vmem:[#allocation5 + $0x10] sm:$0xff]
    %v68 = vld [vmem:[#allocation5 + $0x18] sm:$0xff]
    %v69 = vld [vmem:[#allocation5 + $0x20] sm:$0xff]
    %v70 = vld [vmem:[#allocation5 + $0x28] sm:$0xff]
    %v71 = vld [vmem:[#allocation5 + $0x30] sm:$0xff]
    %v72 = vld [vmem:[#allocation5 + $0x38] sm:$0xff]
    %v73 = vld [vmem:[#allocation5 + $0x40] sm:$0xff]
    %v74 = vld [vmem:[#allocation5 + $0x48] sm:$0xff]
    %v75 = vld [vmem:[#allocation5 + $0x50] sm:$0xff]
    %v76 = vld [vmem:[#allocation5 + $0x58] sm:$0xff]
    %v77 = vld [vmem:[#allocation5 + $0x60] sm:$0xff]
    %v78 = vld [vmem:[#allocation5 + $0x68] sm:$0xff]
    %v79 = vld [vmem:[#allocation5 + $0x70] sm:$0xff]
    %v80 = vld [vmem:[#allocation5 + $0x78] sm:$0xff]
    %v97 = vunpack.c.l.b16 %v65
    %v98 = vunpack.c.h.b16 %v65
    %v99 = vunpack.c.l.b16 %v66
    %v100 = vunpack.c.h.b16 %v66
    %v101 = vunpack.c.l.b16 %v67
    %v102 = vunpack.c.h.b16 %v67
    %v103 = vunpack.c.l.b16 %v68
    %v104 = vunpack.c.h.b16 %v68
    %v105 = vunpack.c.l.b16 %v69
    %v106 = vunpack.c.h.b16 %v69
    %v107 = vunpack.c.l.b16 %v70
    %v108 = vunpack.c.h.b16 %v70
    %v109 = vunpack.c.l.b16 %v71
    %v110 = vunpack.c.h.b16 %v71
    %v111 = vunpack.c.l.b16 %v72
    %v112 = vunpack.c.h.b16 %v72
    %v113 = vunpack.c.l.b16 %v73
    %v114 = vunpack.c.h.b16 %v73
    %v115 = vunpack.c.l.b16 %v74
    %v116 = vunpack.c.h.b16 %v74
    %v117 = vunpack.c.l.b16 %v75
    %v118 = vunpack.c.h.b16 %v75
    %v119 = vunpack.c.l.b16 %v76
    %v120 = vunpack.c.h.b16 %v76
    %v121 = vunpack.c.l.b16 %v77
    %v122 = vunpack.c.h.b16 %v77
    %v123 = vunpack.c.l.b16 %v78
    %v124 = vunpack.c.h.b16 %v78
    %v125 = vunpack.c.l.b16 %v79
    %v126 = vunpack.c.h.b16 %v79
    %v127 = vunpack.c.l.b16 %v80
    %v128 = vunpack.c.h.b16 %v80
    %v129 = vpack.c.b16 %v99, %v97
    %v130 = vpack.c.b16 %v100, %v98
    %v131 = vpack.c.b16 %v103, %v101
    %v132 = vpack.c.b16 %v104, %v102
    %v133 = vpack.c.b16 %v107, %v105
    %v134 = vpack.c.b16 %v108, %v106
    %v135 = vpack.c.b16 %v111, %v109
    %v136 = vpack.c.b16 %v112, %v110
    %v137 = vpack.c.b16 %v115, %v113
    %v138 = vpack.c.b16 %v116, %v114
    %v139 = vpack.c.b16 %v119, %v117
    %v140 = vpack.c.b16 %v120, %v118
    %v141 = vpack.c.b16 %v123, %v121
    %v142 = vpack.c.b16 %v124, %v122
    %v143 = vpack.c.b16 %v127, %v125
    %v144 = vpack.c.b16 %v128, %v126
    %161 = vmatprep.subr.bf16.mxu0 %v144
    %162 = vmatpush1.bf16.msra.mxu0 %v143
    %163 = vmatprep.subr.bf16.mxu0 %v142
    %164 = vmatpush1.bf16.msra.mxu0 %v141
    %165 = vmatprep.subr.bf16.mxu0 %v140
    %166 = vmatpush1.bf16.msra.mxu0 %v139
    %167 = vmatprep.subr.bf16.mxu0 %v138
    %168 = vmatpush1.bf16.msra.mxu0 %v137
    %169 = vmatprep.subr.bf16.mxu0 %v136
    %170 = vmatpush1.bf16.msra.mxu0 %v135
    %171 = vmatprep.subr.bf16.mxu0 %v134
    %172 = vmatpush1.bf16.msra.mxu0 %v133
    %173 = vmatprep.subr.bf16.mxu0 %v132
    %174 = vmatpush1.bf16.msra.mxu0 %v131
    %175 = vmatprep.subr.bf16.mxu0 %v130
    %176 = vmatpush1.bf16.msra.mxu0 %v129
    %177 = vmatprep.subr.bf16.mxu0 0
    %178 = vmatpush2.bf16.msra.mxu0 0
    %179 = vmatprep.subr.bf16.mxu0 0
    %180 = vmatpush2.bf16.msra.mxu0 0
    %181 = vmatprep.subr.bf16.mxu0 0
    %182 = vmatpush2.bf16.msra.mxu0 0
    %183 = vmatprep.subr.bf16.mxu0 0
    %184 = vmatpush2.bf16.msra.mxu0 0
    %185 = vmatprep.subr.bf16.mxu0 0
    %186 = vmatpush2.bf16.msra.mxu0 0
    %187 = vmatprep.subr.bf16.mxu0 0
    %188 = vmatpush2.bf16.msra.mxu0 0
    %189 = vmatprep.subr.bf16.mxu0 0
    %190 = vmatpush2.bf16.msra.mxu0 0
    %191 = vmatprep.subr.bf16.mxu0 0
    %192 = vmatpush2.bf16.msra.mxu0 0
    %193 = vmatprep.mubr.bf16.mxu0 0
    %194 = vmatmul.mubr.bf16.gmra.mxu0 %v57
    %v195 = vpop.f32.mrf.mxu0
    %v196 = vadd.f32 0.0, %v195
    %v197 = vpop.f32.mrf.mxu0
    %v198 = vadd.f32 0.0, %v197
    %v199 = vpop.f32.mrf.mxu0
    %v200 = vadd.f32 0.0, %v199
    %v201 = vpop.f32.mrf.mxu0
    %v202 = vadd.f32 0.0, %v201
    %203 = vmatprep.mubr.bf16.mxu0 0
    %204 = vmatmul.mubr.bf16.gmra.mxu0 %v58
    %v205 = vpop.f32.mrf.mxu0
    %v206 = vadd.f32 0.0, %v205
    %v207 = vpop.f32.mrf.mxu0
    %v208 = vadd.f32 0.0, %v207
    %v209 = vpop.f32.mrf.mxu0
    %v210 = vadd.f32 0.0, %v209
    %v211 = vpop.f32.mrf.mxu0
    %v212 = vadd.f32 0.0, %v211
    %213 = vmatprep.mubr.bf16.mxu0 0
    %214 = vmatmul.mubr.bf16.gmra.mxu0 %v59
    %v215 = vpop.f32.mrf.mxu0
    %v216 = vadd.f32 0.0, %v215
    %v217 = vpop.f32.mrf.mxu0
    %v218 = vadd.f32 0.0, %v217
    %v219 = vpop.f32.mrf.mxu0
    %v220 = vadd.f32 0.0, %v219
    %v221 = vpop.f32.mrf.mxu0
    %v222 = vadd.f32 0.0, %v221
    %223 = vmatprep.mubr.bf16.mxu0 0
    %224 = vmatmul.mubr.bf16.gmra.mxu0 %v60
    %v225 = vpop.f32.mrf.mxu0
    %v226 = vadd.f32 0.0, %v225
    %v227 = vpop.f32.mrf.mxu0
    %v228 = vadd.f32 0.0, %v227
    %v229 = vpop.f32.mrf.mxu0
    %v230 = vadd.f32 0.0, %v229
    %v231 = vpop.f32.mrf.mxu0
    %v232 = vadd.f32 0.0, %v231
    %233 = vmatprep.mubr.bf16.mxu0 0
    %234 = vmatmul.mubr.bf16.gmra.mxu0 %v61
    %v235 = vpop.f32.mrf.mxu0
    %v236 = vadd.f32 0.0, %v235
    %v237 = vpop.f32.mrf.mxu0
    %v238 = vadd.f32 0.0, %v237
    %v239 = vpop.f32.mrf.mxu0
    %v240 = vadd.f32 0.0, %v239
    %v241 = vpop.f32.mrf.mxu0
    %v242 = vadd.f32 0.0, %v241
    %243 = vmatprep.mubr.bf16.mxu0 0
    %244 = vmatmul.mubr.bf16.gmra.mxu0 %v62
    %v245 = vpop.f32.mrf.mxu0
    %v246 = vadd.f32 0.0, %v245
    %v247 = vpop.f32.mrf.mxu0
    %v248 = vadd.f32 0.0, %v247
    %v249 = vpop.f32.mrf.mxu0
    %v250 = vadd.f32 0.0, %v249
    %v251 = vpop.f32.mrf.mxu0
    %v252 = vadd.f32 0.0, %v251
    %253 = vmatprep.mubr.bf16.mxu0 0
    %254 = vmatmul.mubr.bf16.gmra.mxu0 %v63
    %v255 = vpop.f32.mrf.mxu0
    %v256 = vadd.f32 0.0, %v255
    %v257 = vpop.f32.mrf.mxu0
    %v258 = vadd.f32 0.0, %v257
    %v259 = vpop.f32.mrf.mxu0
    %v260 = vadd.f32 0.0, %v259
    %v261 = vpop.f32.mrf.mxu0
    %v262 = vadd.f32 0.0, %v261
    %263 = vmatprep.mubr.bf16.mxu0 0
    %264 = vmatmul.mubr.bf16.gmra.mxu0 %v64
    %v265 = vpop.f32.mrf.mxu0
    %v266 = vadd.f32 0.0, %v265
    %v267 = vpop.f32.mrf.mxu0
    %v268 = vadd.f32 0.0, %v267
    %v269 = vpop.f32.mrf.mxu0
    %v270 = vadd.f32 0.0, %v269
    %v271 = vpop.f32.mrf.mxu0
    %v272 = vadd.f32 0.0, %v271
    %273 = vdwg.mxu0
    %274 = vst [vmem:[#allocation7] sm:$0xff] %v196
    %275 = vst [vmem:[#allocation7 + $0x8] sm:$0xff] %v198
    %276 = vst [vmem:[#allocation7 + $0x10] sm:$0xff] %v200
    %277 = vst [vmem:[#allocation7 + $0x18] sm:$0xff] %v202
    %278 = vst [vmem:[#allocation7 + $0x20] sm:$0xff] %v206
    %279 = vst [vmem:[#allocation7 + $0x28] sm:$0xff] %v208
    %280 = vst [vmem:[#allocation7 + $0x30] sm:$0xff] %v210
    %281 = vst [vmem:[#allocation7 + $0x38] sm:$0xff] %v212
    %282 = vst [vmem:[#allocation7 + $0x40] sm:$0xff] %v216
    %283 = vst [vmem:[#allocation7 + $0x48] sm:$0xff] %v218
    %284 = vst [vmem:[#allocation7 + $0x50] sm:$0xff] %v220
    %285 = vst [vmem:[#allocation7 + $0x58] sm:$0xff] %v222
    %286 = vst [vmem:[#allocation7 + $0x60] sm:$0xff] %v226
    %287 = vst [vmem:[#allocation7 + $0x68] sm:$0xff] %v228
    %288 = vst [vmem:[#allocation7 + $0x70] sm:$0xff] %v230
    %289 = vst [vmem:[#allocation7 + $0x78] sm:$0xff] %v232
    %290 = vst [vmem:[#allocation7 + $0x80] sm:$0xff] %v236
    %291 = vst [vmem:[#allocation7 + $0x88] sm:$0xff] %v238
    %292 = vst [vmem:[#allocation7 + $0x90] sm:$0xff] %v240
    %293 = vst [vmem:[#allocation7 + $0x98] sm:$0xff] %v242
    %294 = vst [vmem:[#allocation7 + $0xa0] sm:$0xff] %v246
    %295 = vst [vmem:[#allocation7 + $0xa8] sm:$0xff] %v248
    %296 = vst [vmem:[#allocation7 + $0xb0] sm:$0xff] %v250
    %297 = vst [vmem:[#allocation7 + $0xb8] sm:$0xff] %v252
    %298 = vst [vmem:[#allocation7 + $0xc0] sm:$0xff] %v256
    %299 = vst [vmem:[#allocation7 + $0xc8] sm:$0xff] %v258
    %300 = vst [vmem:[#allocation7 + $0xd0] sm:$0xff] %v260
    %301 = vst [vmem:[#allocation7 + $0xd8] sm:$0xff] %v262
    %302 = vst [vmem:[#allocation7 + $0xe0] sm:$0xff] %v266
    %303 = vst [vmem:[#allocation7 + $0xe8] sm:$0xff] %v268
    %304 = vst [vmem:[#allocation7 + $0xf0] sm:$0xff] %v270
    %305 = vst [vmem:[#allocation7 + $0xf8] sm:$0xff] %v272
    // Predicated region
    $region18: #{tpu_custom_call.1} parent=1 // pred_check
      _
    $region19: #{tpu_custom_call.1} parent=1 // pred_check_branch
      %307 = sbr.rel (0) target = $region21
    $region20: #{tpu_custom_call.1} parent=1 // pred_region
      %s309 = ssub.s32 4096, 4096
      %310 = vsyncadd [#allocation4], %s309
      %s311 = sshll.u32 [#allocation7], 4
      %s312 = int_to_ptr.vmem [resolvable:$true] %s311
      %317 = dma.vmem_to_hbm [thread:$0]  %s312, 4096, %s2, [#allocation4], 256, 256, 16
    $region21: #{tpu_custom_call.1} parent=1 // pred_fallthru
      _
    // Predicated region
    $region22: #{tpu_custom_call.1} parent=1 // pred_check
      _
    $region23: #{tpu_custom_call.1} parent=1 // pred_check_branch
      %319 = sbr.rel (0) target = $region25
    $region24: #{tpu_custom_call.1} parent=1 // pred_region
      %320 = dma.done [#allocation4], 4096
    $region25: #{tpu_custom_call.1} parent=1 // pred_fallthru
      _
    %321 = vsyncpa [#allocation3], 1
    %322 = vsyncpa [#allocation6], 1
    %323 = vsyncpa [#allocation4], 1

</llo_original>
